<compile_context>
chip_gen: v6e
topology: v6e:2x2x1
jax: 0.10.0
libtpu: 0.0.40
codegen_flags: <defaults>
</compile_context>

<pallas_src>
import jax
import jax.numpy as jnp
from jax import lax
from jax.experimental import pallas as pl
from jax.experimental.pallas import tpu as pltpu


def make_gcn_kernel(layers, mem_dim, head_dim, batch_tile, n_nodes):
    """Builds the Pallas kernel body for a fixed (static) number of GCN layers."""

    def kernel(adj_ref, x_ref, *refs):
        # refs = [W_0, b_0, ..., W_{L-1}, b_{L-1}, W_lin, b_lin, o_ref, state_ref]
        w_refs = refs[: 2 * layers]
        wlin_ref = refs[2 * layers]
        blin_ref = refs[2 * layers + 1]
        o_ref = refs[2 * layers + 2]
        state_ref = refs[2 * layers + 3]

        bt, n = batch_tile, n_nodes

        adj = adj_ref[...].astype(jnp.float32)                 # (bt, N, N), 0/1 exact
        x_flat = x_ref[...].reshape(bt * n, mem_dim)           # (bt*N, D)

        # inv_denom = 1 / (adj.sum(2) + 1), computed once (exact reciprocal).
        denom = jnp.sum(adj, axis=2, keepdims=True) + 1.0      # (bt, N, 1)
        inv_denom = 1.0 / denom

        # adjI = adj + I  (so adjI @ S == adj @ S + S in a single MXU pass).
        row = lax.broadcasted_iota(jnp.int32, (n, n), 0)
        col = lax.broadcasted_iota(jnp.int32, (n, n), 1)
        eye = (row == col).astype(jnp.float32)                 # (N, N)
        adjI = adj + eye[None, :, :]                           # (bt, N, N)

        # Concatenated state [x | gAxW_0 | ... | gAxW_{L-1}] in VMEM scratch.
        state_ref[:, :mem_dim] = x_flat

        for l in range(layers):
            in_dim = mem_dim + l * head_dim
            W = w_refs[2 * l][...]                             # (in_dim, hd)
            b = w_refs[2 * l + 1][...]                         # (1, hd)

            # S = outputs @ W_l ; AxW = (adj + I) @ S + 2*b    (factored form)
            S = jnp.dot(state_ref[:, :in_dim], W,
                        preferred_element_type=jnp.float32)    # (bt*N, hd)
            S_b = S.reshape(bt, n, head_dim)
            adjS = jnp.einsum("bij,bjd->bid", adjI, S_b,
                              preferred_element_type=jnp.float32)

            AxW = (adjS + 2.0 * b) * inv_denom                 # (bt, N, hd)
            gAxW = jnp.maximum(AxW, 0.0)                       # relu; dropout = identity
            colw = mem_dim + l * head_dim
            state_ref[:, colw:colw + head_dim] = gAxW.reshape(bt * n, head_dim)

        # out = Linear(cat(output_list) + gcn_inputs)
        gcn_out = state_ref[:, mem_dim:] + x_flat              # (bt*N, D)
        out = jnp.dot(gcn_out, wlin_ref[...],
                      preferred_element_type=jnp.float32) + blin_ref[...]
        o_ref[...] = out.reshape(bt, n, mem_dim).astype(o_ref.dtype)

    return kernel


def gcn_forward(adj, x, layer_ws, layer_bs, w_lin, b_lin, *,
                layers, mem_dim, head_dim, batch_tile=None):
    B, N, D = x.shape
    assert D == mem_dim and adj.shape == (B, N, N)
    assert layers * head_dim == mem_dim, "module requires mem_dim % layers == 0"

    # Default: one fat grid step (best on single-TC v5e/v6e).  On v7x with
    # large B, pass batch_tile = B // 2 so each TensorCore takes one fat block.
    if batch_tile is None:
        batch_tile = B
    assert B % batch_tile == 0
    n_steps = B // batch_tile

    # adj is 0/1 -> bf16 is exact; halves the O(N^2) HBM traffic for adj.
    adj_bf16 = adj.astype(jnp.bfloat16)

    kernel = make_gcn_kernel(layers, mem_dim, head_dim, batch_tile, N)

    in_specs = [
        pl.BlockSpec((batch_tile, N, N), lambda g: (g, 0, 0)),
        pl.BlockSpec((batch_tile, N, D), lambda g: (g, 0, 0)),
    ]
    args = [adj_bf16, x]
    for l in range(layers):
        W, bb = layer_ws[l], layer_bs[l]
        in_specs.append(pl.BlockSpec(W.shape, lambda g: (0, 0)))
        in_specs.append(pl.BlockSpec(bb.shape, lambda g: (0, 0)))
        args += [W, bb]
    in_specs.append(pl.BlockSpec(w_lin.shape, lambda g: (0, 0)))
    in_specs.append(pl.BlockSpec(b_lin.shape, lambda g: (0, 0)))
    args += [w_lin, b_lin]

    state_width = mem_dim + layers * head_dim

    return pl.pallas_call(
        kernel,
        out_shape=jax.ShapeDtypeStruct((B, N, D), x.dtype),
        grid=(n_steps,),
        in_specs=in_specs,
        out_specs=pl.BlockSpec((batch_tile, N, D), lambda g: (g, 0, 0)),
        scratch_shapes=[pltpu.VMEM((batch_tile * N, state_width), jnp.float32)],
        compiler_params=pltpu.CompilerParams(dimension_semantics=("parallel",)),
    )(*args)


def ref_forward(adj, x, layer_ws, layer_bs, w_lin, b_lin, *, layers):
    """Pure-JAX mirror of the PyTorch forward (dropout = identity)."""
    denom = adj.sum(2)[..., None] + 1.0
    outputs = x
    cache_list = [x]
    output_list = []
    for l in range(layers):
        Ax = jnp.einsum("bij,bjd->bid", adj, outputs)
        AxW = (Ax @ layer_ws[l] + layer_bs[l]) + (outputs @ layer_ws[l] + layer_bs[l])
        AxW = AxW / denom
        gAxW = jax.nn.relu(AxW)
        cache_list.append(gAxW)
        outputs = jnp.concatenate(cache_list, axis=2)
        output_list.append(gAxW)
    gcn_outputs = jnp.concatenate(output_list, axis=2) + x
    return gcn_outputs @ w_lin + b_lin


if __name__ == "__main__":
    # Small, module-consistent shapes.
    B, N = 2, 8
    mem_dim, layers = 32, 2
    head_dim = mem_dim // layers  # 16

    key = jax.random.PRNGKey(0)
    k_adj, k_x, k_w = jax.random.split(key, 3)

    # Binary dependency adjacency and node features.
    adj = (jax.random.uniform(k_adj, (B, N, N)) > 0.5).astype(jnp.float32)
    x = jax.random.normal(k_x, (B, N, mem_dim), dtype=jnp.float32)

    # Deterministic parameter init (weights stored pre-transposed as (in, out)).
    layer_ws, layer_bs = [], []
    wkeys = jax.random.split(k_w, 2 * layers + 2)
    for l in range(layers):
        in_dim = mem_dim + head_dim * l
        layer_ws.append(0.1 * jax.random.normal(wkeys[2 * l], (in_dim, head_dim),
                                                dtype=jnp.float32))
        layer_bs.append(0.1 * jax.random.normal(wkeys[2 * l + 1], (1, head_dim),
                                                dtype=jnp.float32))
    w_lin = 0.1 * jax.random.normal(wkeys[-2], (mem_dim, mem_dim), dtype=jnp.float32)
    b_lin = 0.1 * jax.random.normal(wkeys[-1], (1, mem_dim), dtype=jnp.float32)

    out = gcn_forward(adj, x, layer_ws, layer_bs, w_lin, b_lin,
                      layers=layers, mem_dim=mem_dim, head_dim=head_dim)
    out = jax.block_until_ready(out)

    ref = ref_forward(adj, x, layer_ws, layer_bs, w_lin, b_lin, layers=layers)
    assert out.shape == (B, N, mem_dim)
    assert jnp.allclose(out, ref, atol=1e-4, rtol=1e-4), "mismatch vs JAX reference"

    print("KERNEL_OK")
</pallas_src>

<mosaic_0001>
module attributes {stable_mosaic.version = 11 : i64} {
  func.func @kernel(%arg0: i32, %arg1: memref<2x8x8xbf16, #tpu.memory_space<vmem>>, %arg2: memref<2x8x32xf32, #tpu.memory_space<vmem>>, %arg3: memref<32x16xf32, #tpu.memory_space<vmem>>, %arg4: memref<1x16xf32, #tpu.memory_space<vmem>>, %arg5: memref<48x16xf32, #tpu.memory_space<vmem>>, %arg6: memref<1x16xf32, #tpu.memory_space<vmem>>, %arg7: memref<32x32xf32, #tpu.memory_space<vmem>>, %arg8: memref<1x32xf32, #tpu.memory_space<vmem>>, %arg9: memref<2x8x32xf32, #tpu.memory_space<vmem>>, %arg10: memref<16x64xf32, #tpu.memory_space<vmem>>) attributes {dimension_semantics = [#tpu.dimension_semantics<parallel>], iteration_bounds = array<i64: 1>, scalar_prefetch = 0 : i64, scratch_operands = 1 : i64, tpu.core_type = #tpu.core_type<tc>, window_params = [{transform_indices = @transform_0, window_bounds = array<i64: 2, 8, 8>}, {transform_indices = @transform_1, window_bounds = array<i64: 2, 8, 32>}, {pipeline_mode = #tpu.pipeline_mode<synchronous>, transform_indices = @transform_2, window_bounds = array<i64: 32, 16>}, {pipeline_mode = #tpu.pipeline_mode<synchronous>, transform_indices = @transform_3, window_bounds = array<i64: 1, 16>}, {pipeline_mode = #tpu.pipeline_mode<synchronous>, transform_indices = @transform_4, window_bounds = array<i64: 48, 16>}, {pipeline_mode = #tpu.pipeline_mode<synchronous>, transform_indices = @transform_5, window_bounds = array<i64: 1, 16>}, {pipeline_mode = #tpu.pipeline_mode<synchronous>, transform_indices = @transform_6, window_bounds = array<i64: 32, 32>}, {pipeline_mode = #tpu.pipeline_mode<synchronous>, transform_indices = @transform_7, window_bounds = array<i64: 1, 32>}, {transform_indices = @transform_8, window_bounds = array<i64: 2, 8, 32>}]} {
    %c0 = arith.constant 0 : index
    %c0_0 = arith.constant 0 : index
    %c0_1 = arith.constant 0 : index
    %0 = vector.load %arg1[%c0, %c0_0, %c0_1] : memref<2x8x8xbf16, #tpu.memory_space<vmem>>, vector<2x8x8xbf16>
    %1 = arith.extf %0 : vector<2x8x8xbf16> to vector<2x8x8xf32>
    %c0_2 = arith.constant 0 : index
    %c0_3 = arith.constant 0 : index
    %c0_4 = arith.constant 0 : index
    %2 = vector.load %arg2[%c0_2, %c0_3, %c0_4] : memref<2x8x32xf32, #tpu.memory_space<vmem>>, vector<2x8x32xf32>
    %3 = vector.shape_cast %2 : vector<2x8x32xf32> to vector<16x32xf32>
    %cst = arith.constant dense<0.000000e+00> : vector<2x8xf32>
    %4 = vector.multi_reduction <add>, %1, %cst [2] : vector<2x8x8xf32> to vector<2x8xf32>
    %5 = vector.shape_cast %4 : vector<2x8xf32> to vector<2x8x1xf32>
    %cst_5 = arith.constant 1.000000e+00 : f32
    %6 = vector.broadcast %cst_5 : f32 to vector<2x8x1xf32>
    %7 = arith.addf %5, %6 : vector<2x8x1xf32>
    %cst_6 = arith.constant 1.000000e+00 : f32
    %8 = vector.broadcast %cst_6 : f32 to vector<2x8x1xf32>
    %9 = arith.divf %8, %7 : vector<2x8x1xf32>
    %10 = tpu.iota {dimensions = array<i32: 0>} : vector<8x8xi32>
    %11 = tpu.iota {dimensions = array<i32: 1>} : vector<8x8xi32>
    %12 = arith.cmpi eq, %10, %11 : vector<8x8xi32>
    %13 = arith.extui %12 : vector<8x8xi1> to vector<8x8xi32>
    %14 = arith.sitofp %13 : vector<8x8xi32> to vector<8x8xf32>
    %15 = vector.shape_cast %14 : vector<8x8xf32> to vector<1x8x8xf32>
    %16 = vector.broadcast %15 : vector<1x8x8xf32> to vector<2x8x8xf32>
    %17 = arith.addf %1, %16 : vector<2x8x8xf32>
    %c0_7 = arith.constant 0 : index
    %c0_8 = arith.constant 0 : index
    %18 = vector.load %arg10[%c0_7, %c0_8] : memref<16x64xf32, #tpu.memory_space<vmem>>, vector<16x32xf32>
    tpu.vector_store %arg10[%c0_7, %c0_8], %3 {strides = array<i32>} : memref<16x64xf32, #tpu.memory_space<vmem>>, vector<16x32xf32>,
    %c0_9 = arith.constant 0 : index
    %c0_10 = arith.constant 0 : index
    %19 = vector.load %arg3[%c0_9, %c0_10] : memref<32x16xf32, #tpu.memory_space<vmem>>, vector<32x16xf32>
    %c0_11 = arith.constant 0 : index
    %c0_12 = arith.constant 0 : index
    %20 = vector.load %arg4[%c0_11, %c0_12] : memref<1x16xf32, #tpu.memory_space<vmem>>, vector<1x16xf32>
    %c0_13 = arith.constant 0 : index
    %c0_14 = arith.constant 0 : index
    %21 = vector.load %arg10[%c0_13, %c0_14] : memref<16x64xf32, #tpu.memory_space<vmem>>, vector<16x32xf32>
    %cst_15 = arith.constant dense<0.000000e+00> : vector<16x16xf32>
    %22 = tpu.matmul %21, %19, %cst_15 {dimension_numbers = #tpu.dot_dimension_numbers<[1], [0], [0], [1], [0, 0, 1, 1], [], []>} : vector<16x32xf32>, vector<32x16xf32>, vector<16x16xf32> -> vector<16x16xf32>
    %23 = vector.shape_cast %22 : vector<16x16xf32> to vector<2x8x16xf32>
    "tpu.trace_start"() <{level = 10 : i32, message = "bij,bjd->bid"}> : () -> ()
    %cst_16 = arith.constant dense<0.000000e+00> : vector<2x8x16xf32>
    %24 = tpu.matmul %17, %23, %cst_16 {dimension_numbers = #tpu.dot_dimension_numbers<[2], [1], [1], [2], [0, 0, 0, 1, 1, 2], [0], [0]>} : vector<2x8x8xf32>, vector<2x8x16xf32>, vector<2x8x16xf32> -> vector<2x8x16xf32>
    "tpu.trace_stop"() : () -> ()
    %cst_17 = arith.constant 2.000000e+00 : f32
    %25 = vector.broadcast %cst_17 : f32 to vector<1x16xf32>
    %26 = arith.mulf %25, %20 : vector<1x16xf32>
    %27 = vector.shape_cast %26 : vector<1x16xf32> to vector<1x1x16xf32>
    %28 = vector.broadcast %27 : vector<1x1x16xf32> to vector<2x8x16xf32>
    %29 = arith.addf %24, %28 : vector<2x8x16xf32>
    %30 = vector.broadcast %9 : vector<2x8x1xf32> to vector<2x8x16xf32>
    %31 = arith.mulf %29, %30 : vector<2x8x16xf32>
    %cst_18 = arith.constant 0.000000e+00 : f32
    %32 = vector.broadcast %cst_18 : f32 to vector<2x8x16xf32>
    %33 = arith.maximumf %31, %32 : vector<2x8x16xf32>
    %34 = vector.shape_cast %33 : vector<2x8x16xf32> to vector<16x16xf32>
    %c0_19 = arith.constant 0 : index
    %c32 = arith.constant 32 : index
    %35 = vector.load %arg10[%c0_19, %c32] : memref<16x64xf32, #tpu.memory_space<vmem>>, vector<16x16xf32>
    tpu.vector_store %arg10[%c0_19, %c32], %34 {strides = array<i32>} : memref<16x64xf32, #tpu.memory_space<vmem>>, vector<16x16xf32>,
    %c0_20 = arith.constant 0 : index
    %c0_21 = arith.constant 0 : index
    %36 = vector.load %arg5[%c0_20, %c0_21] : memref<48x16xf32, #tpu.memory_space<vmem>>, vector<48x16xf32>
    %c0_22 = arith.constant 0 : index
    %c0_23 = arith.constant 0 : index
    %37 = vector.load %arg6[%c0_22, %c0_23] : memref<1x16xf32, #tpu.memory_space<vmem>>, vector<1x16xf32>
    %c0_24 = arith.constant 0 : index
    %c0_25 = arith.constant 0 : index
    %38 = vector.load %arg10[%c0_24, %c0_25] : memref<16x64xf32, #tpu.memory_space<vmem>>, vector<16x48xf32>
    %cst_26 = arith.constant dense<0.000000e+00> : vector<16x16xf32>
    %39 = tpu.matmul %38, %36, %cst_26 {dimension_numbers = #tpu.dot_dimension_numbers<[1], [0], [0], [1], [0, 0, 1, 1], [], []>} : vector<16x48xf32>, vector<48x16xf32>, vector<16x16xf32> -> vector<16x16xf32>
    %40 = vector.shape_cast %39 : vector<16x16xf32> to vector<2x8x16xf32>
    "tpu.trace_start"() <{level = 10 : i32, message = "bij,bjd->bid"}> : () -> ()
    %cst_27 = arith.constant dense<0.000000e+00> : vector<2x8x16xf32>
    %41 = tpu.matmul %17, %40, %cst_27 {dimension_numbers = #tpu.dot_dimension_numbers<[2], [1], [1], [2], [0, 0, 0, 1, 1, 2], [0], [0]>} : vector<2x8x8xf32>, vector<2x8x16xf32>, vector<2x8x16xf32> -> vector<2x8x16xf32>
    "tpu.trace_stop"() : () -> ()
    %cst_28 = arith.constant 2.000000e+00 : f32
    %42 = vector.broadcast %cst_28 : f32 to vector<1x16xf32>
    %43 = arith.mulf %42, %37 : vector<1x16xf32>
    %44 = vector.shape_cast %43 : vector<1x16xf32> to vector<1x1x16xf32>
    %45 = vector.broadcast %44 : vector<1x1x16xf32> to vector<2x8x16xf32>
    %46 = arith.addf %41, %45 : vector<2x8x16xf32>
    %47 = vector.broadcast %9 : vector<2x8x1xf32> to vector<2x8x16xf32>
    %48 = arith.mulf %46, %47 : vector<2x8x16xf32>
    %cst_29 = arith.constant 0.000000e+00 : f32
    %49 = vector.broadcast %cst_29 : f32 to vector<2x8x16xf32>
    %50 = arith.maximumf %48, %49 : vector<2x8x16xf32>
    %51 = vector.shape_cast %50 : vector<2x8x16xf32> to vector<16x16xf32>
    %c0_30 = arith.constant 0 : index
    %c48 = arith.constant 48 : index
    %52 = vector.load %arg10[%c0_30, %c48] : memref<16x64xf32, #tpu.memory_space<vmem>>, vector<16x16xf32>
    tpu.vector_store %arg10[%c0_30, %c48], %51 {strides = array<i32>} : memref<16x64xf32, #tpu.memory_space<vmem>>, vector<16x16xf32>,
    %c0_31 = arith.constant 0 : index
    %c32_32 = arith.constant 32 : index
    %53 = vector.load %arg10[%c0_31, %c32_32] : memref<16x64xf32, #tpu.memory_space<vmem>>, vector<16x32xf32>
    %54 = arith.addf %53, %3 : vector<16x32xf32>
    %c0_33 = arith.constant 0 : index
    %c0_34 = arith.constant 0 : index
    %55 = vector.load %arg7[%c0_33, %c0_34] : memref<32x32xf32, #tpu.memory_space<vmem>>, vector<32x32xf32>
    %cst_35 = arith.constant dense<0.000000e+00> : vector<16x32xf32>
    %56 = tpu.matmul %54, %55, %cst_35 {dimension_numbers = #tpu.dot_dimension_numbers<[1], [0], [0], [1], [0, 0, 1, 1], [], []>} : vector<16x32xf32>, vector<32x32xf32>, vector<16x32xf32> -> vector<16x32xf32>
    %c0_36 = arith.constant 0 : index
    %c0_37 = arith.constant 0 : index
    %57 = vector.load %arg8[%c0_36, %c0_37] : memref<1x32xf32, #tpu.memory_space<vmem>>, vector<1x32xf32>
    %58 = vector.broadcast %57 : vector<1x32xf32> to vector<16x32xf32>
    %59 = arith.addf %56, %58 : vector<16x32xf32>
    %60 = vector.shape_cast %59 : vector<16x32xf32> to vector<2x8x32xf32>
    %c0_38 = arith.constant 0 : index
    %c0_39 = arith.constant 0 : index
    %c0_40 = arith.constant 0 : index
    %61 = vector.load %arg9[%c0_38, %c0_39, %c0_40] : memref<2x8x32xf32, #tpu.memory_space<vmem>>, vector<2x8x32xf32>
    tpu.vector_store %arg9[%c0_38, %c0_39, %c0_40], %60 {strides = array<i32>} : memref<2x8x32xf32, #tpu.memory_space<vmem>>, vector<2x8x32xf32>,
    return
  }
  func.func @transform_0(%arg0: i32) -> (i32, i32, i32) {
    %c0_i32 = arith.constant 0 : i32
    %c0_i32_0 = arith.constant 0 : i32
    %c0_i32_1 = arith.constant 0 : i32
    return %arg0, %c0_i32, %c0_i32_0 : i32, i32, i32
  }
  func.func @transform_1(%arg0: i32) -> (i32, i32, i32) {
    %c0_i32 = arith.constant 0 : i32
    %c0_i32_0 = arith.constant 0 : i32
    %c0_i32_1 = arith.constant 0 : i32
    return %arg0, %c0_i32, %c0_i32_0 : i32, i32, i32
  }
  func.func @transform_2(%arg0: i32) -> (i32, i32) {
    %c0_i32 = arith.constant 0 : i32
    %c0_i32_0 = arith.constant 0 : i32
    %c0_i32_1 = arith.constant 0 : i32
    return %c0_i32, %c0_i32_0 : i32, i32
  }
  func.func @transform_3(%arg0: i32) -> (i32, i32) {
    %c0_i32 = arith.constant 0 : i32
    %c0_i32_0 = arith.constant 0 : i32
    %c0_i32_1 = arith.constant 0 : i32
    return %c0_i32, %c0_i32_0 : i32, i32
  }
  func.func @transform_4(%arg0: i32) -> (i32, i32) {
    %c0_i32 = arith.constant 0 : i32
    %c0_i32_0 = arith.constant 0 : i32
    %c0_i32_1 = arith.constant 0 : i32
    return %c0_i32, %c0_i32_0 : i32, i32
  }
  func.func @transform_5(%arg0: i32) -> (i32, i32) {
    %c0_i32 = arith.constant 0 : i32
    %c0_i32_0 = arith.constant 0 : i32
    %c0_i32_1 = arith.constant 0 : i32
    return %c0_i32, %c0_i32_0 : i32, i32
  }
  func.func @transform_6(%arg0: i32) -> (i32, i32) {
    %c0_i32 = arith.constant 0 : i32
    %c0_i32_0 = arith.constant 0 : i32
    %c0_i32_1 = arith.constant 0 : i32
    return %c0_i32, %c0_i32_0 : i32, i32
  }
  func.func @transform_7(%arg0: i32) -> (i32, i32) {
    %c0_i32 = arith.constant 0 : i32
    %c0_i32_0 = arith.constant 0 : i32
    %c0_i32_1 = arith.constant 0 : i32
    return %c0_i32, %c0_i32_0 : i32, i32
  }
  func.func @transform_8(%arg0: i32) -> (i32, i32, i32) {
    %c0_i32 = arith.constant 0 : i32
    %c0_i32_0 = arith.constant 0 : i32
    %c0_i32_1 = arith.constant 0 : i32
    return %arg0, %c0_i32, %c0_i32_0 : i32, i32, i32
  }
}

</mosaic_0001>

<llo_original>
// kernel: tpu_custom_call.1
$region0: #{tpu_custom_call.1}
  #allocation0 [shape = 'u32[]', space=smem, size = 0x4, offset = 0x4, fixed_abs, tag = 'smem constant byte address 0x4 - core index']
  #allocation1 [shape = 'u32[144,128]{1,0:T(1,128)}', space=vmem, size = 0x12000, scoped, tag = 'internal scratch']
  #allocation2 [shape = 'f32[16,64]{1,0:T(8,128)}', space=vmem, size = 0x2000, scoped, tag = 'scratch operand']
  %s0 = inlined_call_operand.vmem [shape: bf16[2,8,8], index: 0, kind: input, shape index: {}]
  %s1 = inlined_call_operand.vmem [shape: f32[2,8,32], index: 1, kind: input, shape index: {}]
  %s2 = inlined_call_operand.vmem [shape: f32[32,16], index: 2, kind: input, shape index: {}]
  %s3 = inlined_call_operand.vmem [shape: f32[1,16], index: 3, kind: input, shape index: {}]
  %s4 = inlined_call_operand.vmem [shape: f32[48,16], index: 4, kind: input, shape index: {}]
  %s5 = inlined_call_operand.vmem [shape: f32[1,16], index: 5, kind: input, shape index: {}]
  %s6 = inlined_call_operand.vmem [shape: f32[32,32], index: 6, kind: input, shape index: {}]
  %s7 = inlined_call_operand.vmem [shape: f32[1,32], index: 7, kind: input, shape index: {}]
  %s8 = inlined_call_operand.hbm [shape: f32[2,8,32], index: 8, kind: output, shape index: {}]
  %s9 = sld [smem:[#allocation0]]
  $region42: #{tpu_custom_call.1} parent=0
    _
  %s11 = ssub.s32 1, %s9
  %s12 = scalar_select 0, %s11, %s9
  $region1: #{tpu_custom_call.1} parent=0
    #allocation3 [shape = 'u8[8192]{0}', space=vmem, size = 0x2000, scoped, tag = 'output window, operand 0, single buffered']
    #allocation4 [shape = 's32[1]{0}', space=sflag, size = 0x4, scoped, tag = 'scoped memory for tpu_custom_call.1']
    %13 = vsyncpa [#allocation4], 0
    // Predicated region
    $region2: #{tpu_custom_call.1} parent=1 // pred_check
      _
    $region3: #{tpu_custom_call.1} parent=1 // pred_check_branch
      %15 = sbr.rel (0) target = $region5
    $region4: #{tpu_custom_call.1} parent=1 // pred_region
      _
    $region5: #{tpu_custom_call.1} parent=1 // pred_fallthru
      _
    // Predicated region
    $region6: #{tpu_custom_call.1} parent=1 // pred_check
      _
    $region7: #{tpu_custom_call.1} parent=1 // pred_check_branch
      %17 = sbr.rel (0) target = $region9
    $region8: #{tpu_custom_call.1} parent=1 // pred_region
      _
    $region9: #{tpu_custom_call.1} parent=1 // pred_fallthru
      _
    // Predicated region
    $region10: #{tpu_custom_call.1} parent=1 // pred_check
      _
    $region11: #{tpu_custom_call.1} parent=1 // pred_check_branch
      %19 = sbr.rel (0) target = $region13
    $region12: #{tpu_custom_call.1} parent=1 // pred_region
      _
    $region13: #{tpu_custom_call.1} parent=1 // pred_fallthru
      _
    // Predicated region
    $region14: #{tpu_custom_call.1} parent=1 // pred_check
      _
    $region15: #{tpu_custom_call.1} parent=1 // pred_check_branch
      %21 = sbr.rel (0) target = $region17
    $region16: #{tpu_custom_call.1} parent=1 // pred_region
      _
    $region17: #{tpu_custom_call.1} parent=1 // pred_fallthru
      _
    // Predicated region
    $region18: #{tpu_custom_call.1} parent=1 // pred_check
      _
    $region19: #{tpu_custom_call.1} parent=1 // pred_check_branch
      %23 = sbr.rel (0) target = $region21
    $region20: #{tpu_custom_call.1} parent=1 // pred_region
      _
    $region21: #{tpu_custom_call.1} parent=1 // pred_fallthru
      _
    // Predicated region
    $region22: #{tpu_custom_call.1} parent=1 // pred_check
      _
    $region23: #{tpu_custom_call.1} parent=1 // pred_check_branch
      %25 = sbr.rel (0) target = $region25
    $region24: #{tpu_custom_call.1} parent=1 // pred_region
      _
    $region25: #{tpu_custom_call.1} parent=1 // pred_fallthru
      _
    // Predicated region
    $region26: #{tpu_custom_call.1} parent=1 // pred_check
      _
    $region27: #{tpu_custom_call.1} parent=1 // pred_check_branch
      %27 = sbr.rel (0) target = $region29
    $region28: #{tpu_custom_call.1} parent=1 // pred_region
      _
    $region29: #{tpu_custom_call.1} parent=1 // pred_fallthru
      _
    // Predicated region
    $region30: #{tpu_custom_call.1} parent=1 // pred_check
      _
    $region31: #{tpu_custom_call.1} parent=1 // pred_check_branch
      %29 = sbr.rel (0) target = $region33
    $region32: #{tpu_custom_call.1} parent=1 // pred_region
      _
    $region33: #{tpu_custom_call.1} parent=1 // pred_fallthru
      _
    %v30 = vld [vmem:[%s0] sm:$0xf]
    %v31 = vld [vmem:[%s0 + $0x4] sm:$0xf]
    %v32 = vunpack.c.l.bf16 %v30
    %v33 = vunpack.c.l.bf16 %v31
    %v34 = vld [vmem:[%s1] sm:$0xff]
    %v35 = vld [vmem:[%s1 + $0x8] sm:$0xff]
    %vm36 = vcmask 64512
    %v37 = vsel %vm36, %v32, 0.0
    %38 = vadd.xlane.f32.xlu0 %v37
    %v39 = vpop.xlane.xlu0 %38
    %v40 = vsel %vm36, %v33, 0.0
    %41 = vadd.xlane.f32.xlu0 %v40
    %v42 = vpop.xlane.xlu0 %41
    %v43 = vadd.f32 %v39, 1.0
    %v44 = vadd.f32 %v42, 1.0
    %v45 = vrcp.pop %v43
    %v46 = vmul.f32 1.0, %v45
    %v47 = vrcp.pop %v44
    %v48 = vmul.f32 1.0, %v47
    %v49 = vlaneseq
    %v50 = vshrl.u32 %v49, 7
    %v51 = vlaneseq
    %v52 = vand.u32 %v51, 127
    %vm53 = vcmp.eq.s32.totalorder %v50, %v52
    %v54 = vsel %vm53, 1, 0
    %v55 = vcvt.s32.f32 %v54
    %v56 = vadd.f32 %v32, %v55
    %v57 = vadd.f32 %v33, %v55
    %vm58 = vcmask 261120
    %59 = vst.msk [vmem:[#allocation2] sm:$0xff] %vm58, %v34
    %60 = vst.msk [vmem:[#allocation2 + $0x8] sm:$0xff] %vm58, %v35
    %v61 = vld [vmem:[%s2] sm:$0xff]
    %v62 = vld [vmem:[%s2 + $0x8] sm:$0xff]
    %v63 = vld [vmem:[%s2 + $0x10] sm:$0xff]
    %v64 = vld [vmem:[%s2 + $0x18] sm:$0xff]
    %v65 = vld [vmem:[%s3] sm:$0x1]
    %v66 = vld [vmem:[#allocation2] sm:$0xff]
    %v67 = vld [vmem:[#allocation2 + $0x8] sm:$0xff]
    %v69 = vsel %vm58, %v66, 0
    %v72 = vsel %vm58, %v67, 0
    %74 = vmatprep.subr.mxu0 0.0
    %75 = vmatpush1.msra.mxu0 0.0
    %76 = vmatprep.subr.mxu0 0.0
    %77 = vmatpush1.msra.mxu0 0.0
    %78 = vmatprep.subr.mxu0 0.0
    %79 = vmatpush1.msra.mxu0 0.0
    %80 = vmatprep.subr.mxu0 0.0
    %81 = vmatpush1.msra.mxu0 0.0
    %82 = vmatprep.subr.mxu0 0.0
    %83 = vmatpush1.msra.mxu0 0.0
    %84 = vmatprep.subr.mxu0 0.0
    %85 = vmatpush1.msra.mxu0 0.0
    %86 = vmatprep.subr.mxu0 0.0
    %87 = vmatpush1.msra.mxu0 0.0
    %88 = vmatprep.subr.mxu0 0.0
    %89 = vmatpush1.msra.mxu0 0.0
    %90 = vmatprep.subr.mxu0 0.0
    %91 = vmatpush1.msra.mxu0 0.0
    %92 = vmatprep.subr.mxu0 0.0
    %93 = vmatpush1.msra.mxu0 0.0
    %94 = vmatprep.subr.mxu0 0.0
    %95 = vmatpush1.msra.mxu0 0.0
    %96 = vmatprep.subr.mxu0 0.0
    %97 = vmatpush1.msra.mxu0 0.0
    %98 = vmatprep.subr.mxu0 0.0
    %99 = vmatpush1.msra.mxu0 %v64
    %100 = vmatprep.subr.mxu0 0.0
    %101 = vmatpush1.msra.mxu0 %v63
    %102 = vmatprep.subr.mxu0 0.0
    %103 = vmatpush1.msra.mxu0 %v62
    %104 = vmatprep.subr.mxu0 0.0
    %105 = vmatpush1.msra.mxu0 %v61
    %106 = vmatprep.subr.mxu0 0.0
    %107 = vmatpush2.msra.mxu0 0.0
    %108 = vmatprep.subr.mxu0 0.0
    %109 = vmatpush2.msra.mxu0 0.0
    %110 = vmatprep.subr.mxu0 0.0
    %111 = vmatpush2.msra.mxu0 0.0
    %112 = vmatprep.subr.mxu0 0.0
    %113 = vmatpush2.msra.mxu0 0.0
    %114 = vmatprep.subr.mxu0 0.0
    %115 = vmatpush2.msra.mxu0 0.0
    %116 = vmatprep.subr.mxu0 0.0
    %117 = vmatpush2.msra.mxu0 0.0
    %118 = vmatprep.subr.mxu0 0.0
    %119 = vmatpush2.msra.mxu0 0.0
    %120 = vmatprep.subr.mxu0 0.0
    %121 = vmatpush2.msra.mxu0 0.0
    %122 = vmatprep.subr.mxu0 0.0
    %123 = vmatpush2.msra.mxu0 0.0
    %124 = vmatprep.subr.mxu0 0.0
    %125 = vmatpush2.msra.mxu0 0.0
    %126 = vmatprep.subr.mxu0 0.0
    %127 = vmatpush2.msra.mxu0 0.0
    %128 = vmatprep.subr.mxu0 0.0
    %129 = vmatpush2.msra.mxu0 0.0
    %130 = vmatprep.subr.mxu0 0.0
    %131 = vmatpush2.msra.mxu0 0.0
    %132 = vmatprep.subr.mxu0 0.0
    %133 = vmatpush2.msra.mxu0 0.0
    %134 = vmatprep.subr.mxu0 0.0
    %135 = vmatpush2.msra.mxu0 0.0
    %136 = vmatprep.subr.mxu0 0.0
    %137 = vmatpush2.msra.mxu0 0.0
    %138 = vmatprep.mubr.f32.mxu0 0.0
    %139 = vmatmul.mubr.f32.gmra.mxu0 %v69
    %v140 = vpop.f32.mrf.mxu0
    %v141 = vadd.f32 0.0, %v140
    %v142 = vpop.f32.mrf.mxu0
    %143 = vmatprep.mubr.f32.mxu0 0.0
    %144 = vmatmul.mubr.f32.gmra.mxu0 %v72
    %v145 = vpop.f32.mrf.mxu0
    %v146 = vadd.f32 0.0, %v145
    %v147 = vpop.f32.mrf.mxu0
    %148 = vdwg.mxu0
    %v149 = vmul.f32 %v65, 2.0
    %v151 = vlaneseq
    %v152 = vshrl.u32 %v151, 7
    %v153 = vsub.s32 0, %v152
    %v154 = vrot.slane %v149, %v153
    %v157 = vsel %vm36, %v56, 0
    %159 = vmatprep.subr.mxu0 0.0
    %160 = vmatpush1.msra.mxu0 0.0
    %161 = vmatprep.subr.mxu0 0.0
    %162 = vmatpush1.msra.mxu0 0.0
    %163 = vmatprep.subr.mxu0 0.0
    %164 = vmatpush1.msra.mxu0 0.0
    %165 = vmatprep.subr.mxu0 0.0
    %166 = vmatpush1.msra.mxu0 0.0
    %167 = vmatprep.subr.mxu0 0.0
    %168 = vmatpush1.msra.mxu0 0.0
    %169 = vmatprep.subr.mxu0 0.0
    %170 = vmatpush1.msra.mxu0 0.0
    %171 = vmatprep.subr.mxu0 0.0
    %172 = vmatpush1.msra.mxu0 0.0
    %173 = vmatprep.subr.mxu0 0.0
    %174 = vmatpush1.msra.mxu0 0.0
    %175 = vmatprep.subr.mxu0 0.0
    %176 = vmatpush1.msra.mxu0 0.0
    %177 = vmatprep.subr.mxu0 0.0
    %178 = vmatpush1.msra.mxu0 0.0
    %179 = vmatprep.subr.mxu0 0.0
    %180 = vmatpush1.msra.mxu0 0.0
    %181 = vmatprep.subr.mxu0 0.0
    %182 = vmatpush1.msra.mxu0 0.0
    %183 = vmatprep.subr.mxu0 0.0
    %184 = vmatpush1.msra.mxu0 0.0
    %185 = vmatprep.subr.mxu0 0.0
    %186 = vmatpush1.msra.mxu0 0.0
    %187 = vmatprep.subr.mxu0 0.0
    %188 = vmatpush1.msra.mxu0 0.0
    %189 = vmatprep.subr.mxu0 0.0
    %190 = vmatpush1.msra.mxu0 %v141
    %191 = vmatprep.subr.mxu0 0.0
    %192 = vmatpush2.msra.mxu0 0.0
    %193 = vmatprep.subr.mxu0 0.0
    %194 = vmatpush2.msra.mxu0 0.0
    %195 = vmatprep.subr.mxu0 0.0
    %196 = vmatpush2.msra.mxu0 0.0
    %197 = vmatprep.subr.mxu0 0.0
    %198 = vmatpush2.msra.mxu0 0.0
    %199 = vmatprep.subr.mxu0 0.0
    %200 = vmatpush2.msra.mxu0 0.0
    %201 = vmatprep.subr.mxu0 0.0
    %202 = vmatpush2.msra.mxu0 0.0
    %203 = vmatprep.subr.mxu0 0.0
    %204 = vmatpush2.msra.mxu0 0.0
    %205 = vmatprep.subr.mxu0 0.0
    %206 = vmatpush2.msra.mxu0 0.0
    %207 = vmatprep.subr.mxu0 0.0
    %208 = vmatpush2.msra.mxu0 0.0
    %209 = vmatprep.subr.mxu0 0.0
    %210 = vmatpush2.msra.mxu0 0.0
    %211 = vmatprep.subr.mxu0 0.0
    %212 = vmatpush2.msra.mxu0 0.0
    %213 = vmatprep.subr.mxu0 0.0
    %214 = vmatpush2.msra.mxu0 0.0
    %215 = vmatprep.subr.mxu0 0.0
    %216 = vmatpush2.msra.mxu0 0.0
    %217 = vmatprep.subr.mxu0 0.0
    %218 = vmatpush2.msra.mxu0 0.0
    %219 = vmatprep.subr.mxu0 0.0
    %220 = vmatpush2.msra.mxu0 0.0
    %221 = vmatprep.subr.mxu0 0.0
    %222 = vmatpush2.msra.mxu0 0.0
    %223 = vmatprep.mubr.f32.mxu0 0.0
    %224 = vmatmul.mubr.f32.gmra.mxu0 %v157
    %v225 = vpop.f32.mrf.mxu0
    %v226 = vadd.f32 %v154, %v225
    %v227 = vpop.f32.mrf.mxu0
    %228 = vdwg.mxu0
    %v230 = vsel %vm36, %v57, 0
    %232 = vmatprep.subr.mxu0 0.0
    %233 = vmatpush1.msra.mxu0 0.0
    %234 = vmatprep.subr.mxu0 0.0
    %235 = vmatpush1.msra.mxu0 0.0
    %236 = vmatprep.subr.mxu0 0.0
    %237 = vmatpush1.msra.mxu0 0.0
    %238 = vmatprep.subr.mxu0 0.0
    %239 = vmatpush1.msra.mxu0 0.0
    %240 = vmatprep.subr.mxu0 0.0
    %241 = vmatpush1.msra.mxu0 0.0
    %242 = vmatprep.subr.mxu0 0.0
    %243 = vmatpush1.msra.mxu0 0.0
    %244 = vmatprep.subr.mxu0 0.0
    %245 = vmatpush1.msra.mxu0 0.0
    %246 = vmatprep.subr.mxu0 0.0
    %247 = vmatpush1.msra.mxu0 0.0
    %248 = vmatprep.subr.mxu0 0.0
    %249 = vmatpush1.msra.mxu0 0.0
    %250 = vmatprep.subr.mxu0 0.0
    %251 = vmatpush1.msra.mxu0 0.0
    %252 = vmatprep.subr.mxu0 0.0
    %253 = vmatpush1.msra.mxu0 0.0
    %254 = vmatprep.subr.mxu0 0.0
    %255 = vmatpush1.msra.mxu0 0.0
    %256 = vmatprep.subr.mxu0 0.0
    %257 = vmatpush1.msra.mxu0 0.0
    %258 = vmatprep.subr.mxu0 0.0
    %259 = vmatpush1.msra.mxu0 0.0
    %260 = vmatprep.subr.mxu0 0.0
    %261 = vmatpush1.msra.mxu0 0.0
    %262 = vmatprep.subr.mxu0 0.0
    %263 = vmatpush1.msra.mxu0 %v146
    %264 = vmatprep.subr.mxu0 0.0
    %265 = vmatpush2.msra.mxu0 0.0
    %266 = vmatprep.subr.mxu0 0.0
    %267 = vmatpush2.msra.mxu0 0.0
    %268 = vmatprep.subr.mxu0 0.0
    %269 = vmatpush2.msra.mxu0 0.0
    %270 = vmatprep.subr.mxu0 0.0
    %271 = vmatpush2.msra.mxu0 0.0
    %272 = vmatprep.subr.mxu0 0.0
    %273 = vmatpush2.msra.mxu0 0.0
    %274 = vmatprep.subr.mxu0 0.0
    %275 = vmatpush2.msra.mxu0 0.0
    %276 = vmatprep.subr.mxu0 0.0
    %277 = vmatpush2.msra.mxu0 0.0
    %278 = vmatprep.subr.mxu0 0.0
    %279 = vmatpush2.msra.mxu0 0.0
    %280 = vmatprep.subr.mxu0 0.0
    %281 = vmatpush2.msra.mxu0 0.0
    %282 = vmatprep.subr.mxu0 0.0
    %283 = vmatpush2.msra.mxu0 0.0
    %284 = vmatprep.subr.mxu0 0.0
    %285 = vmatpush2.msra.mxu0 0.0
    %286 = vmatprep.subr.mxu0 0.0
    %287 = vmatpush2.msra.mxu0 0.0
    %288 = vmatprep.subr.mxu0 0.0
    %289 = vmatpush2.msra.mxu0 0.0
    %290 = vmatprep.subr.mxu0 0.0
    %291 = vmatpush2.msra.mxu0 0.0
    %292 = vmatprep.subr.mxu0 0.0
    %293 = vmatpush2.msra.mxu0 0.0
    %294 = vmatprep.subr.mxu0 0.0
    %295 = vmatpush2.msra.mxu0 0.0
    %296 = vmatprep.mubr.f32.mxu0 0.0
    %297 = vmatmul.mubr.f32.gmra.mxu0 %v230
    %v298 = vpop.f32.mrf.mxu0
    %v299 = vadd.f32 %v154, %v298
    %v300 = vpop.f32.mrf.mxu0
    %301 = vdwg.mxu0
    %v302 = vmul.f32 %v226, %v46
    %v303 = vmul.f32 %v299, %v48
    %v304 = vmax.f32 %v302, 0.0
    %v305 = vmax.f32 %v303, 0.0
    %308 = vrot.lane.b32.xlu0 %v304, 32
    %v309 = vpop.permute.xlu0 %308
    %310 = vrot.lane.b32.xlu0 %v305, 32
    %v311 = vpop.permute.xlu0 %310
    %vm314 = vcmask 392448
    %315 = vst.msk [vmem:[#allocation2] sm:$0xff] %vm314, %v309
    %316 = vst.msk [vmem:[#allocation2 + $0x8] sm:$0xff] %vm314, %v311
    %v317 = vld [vmem:[%s4] sm:$0xff]
    %v318 = vld [vmem:[%s4 + $0x8] sm:$0xff]
    %v319 = vld [vmem:[%s4 + $0x10] sm:$0xff]
    %v320 = vld [vmem:[%s4 + $0x18] sm:$0xff]
    %v321 = vld [vmem:[%s4 + $0x20] sm:$0xff]
    %v322 = vld [vmem:[%s4 + $0x28] sm:$0xff]
    %v323 = vld [vmem:[%s5] sm:$0x1]
    %v324 = vld [vmem:[#allocation2] sm:$0xff]
    %v325 = vld [vmem:[#allocation2 + $0x8] sm:$0xff]
    %vm326 = vcmask 392192
    %v328 = vsel %vm326, %v324, 0
    %v331 = vsel %vm326, %v325, 0
    %333 = vmatprep.subr.mxu0 0.0
    %334 = vmatpush1.msra.mxu0 0.0
    %335 = vmatprep.subr.mxu0 0.0
    %336 = vmatpush1.msra.mxu0 0.0
    %337 = vmatprep.subr.mxu0 0.0
    %338 = vmatpush1.msra.mxu0 0.0
    %339 = vmatprep.subr.mxu0 0.0
    %340 = vmatpush1.msra.mxu0 0.0
    %341 = vmatprep.subr.mxu0 0.0
    %342 = vmatpush1.msra.mxu0 0.0
    %343 = vmatprep.subr.mxu0 0.0
    %344 = vmatpush1.msra.mxu0 0.0
    %345 = vmatprep.subr.mxu0 0.0
    %346 = vmatpush1.msra.mxu0 0.0
    %347 = vmatprep.subr.mxu0 0.0
    %348 = vmatpush1.msra.mxu0 0.0
    %349 = vmatprep.subr.mxu0 0.0
    %350 = vmatpush1.msra.mxu0 0.0
    %351 = vmatprep.subr.mxu0 0.0
    %352 = vmatpush1.msra.mxu0 0.0
    %353 = vmatprep.subr.mxu0 0.0
    %354 = vmatpush1.msra.mxu0 %v322
    %355 = vmatprep.subr.mxu0 0.0
    %356 = vmatpush1.msra.mxu0 %v321
    %357 = vmatprep.subr.mxu0 0.0
    %358 = vmatpush1.msra.mxu0 %v320
    %359 = vmatprep.subr.mxu0 0.0
    %360 = vmatpush1.msra.mxu0 %v319
    %361 = vmatprep.subr.mxu0 0.0
    %362 = vmatpush1.msra.mxu0 %v318
    %363 = vmatprep.subr.mxu0 0.0
    %364 = vmatpush1.msra.mxu0 %v317
    %365 = vmatprep.subr.mxu0 0.0
    %366 = vmatpush2.msra.mxu0 0.0
    %367 = vmatprep.subr.mxu0 0.0
    %368 = vmatpush2.msra.mxu0 0.0
    %369 = vmatprep.subr.mxu0 0.0
    %370 = vmatpush2.msra.mxu0 0.0
    %371 = vmatprep.subr.mxu0 0.0
    %372 = vmatpush2.msra.mxu0 0.0
    %373 = vmatprep.subr.mxu0 0.0
    %374 = vmatpush2.msra.mxu0 0.0
    %375 = vmatprep.subr.mxu0 0.0
    %376 = vmatpush2.msra.mxu0 0.0
    %377 = vmatprep.subr.mxu0 0.0
    %378 = vmatpush2.msra.mxu0 0.0
    %379 = vmatprep.subr.mxu0 0.0
    %380 = vmatpush2.msra.mxu0 0.0
    %381 = vmatprep.subr.mxu0 0.0
    %382 = vmatpush2.msra.mxu0 0.0
    %383 = vmatprep.subr.mxu0 0.0
    %384 = vmatpush2.msra.mxu0 0.0
    %385 = vmatprep.subr.mxu0 0.0
    %386 = vmatpush2.msra.mxu0 0.0
    %387 = vmatprep.subr.mxu0 0.0
    %388 = vmatpush2.msra.mxu0 0.0
    %389 = vmatprep.subr.mxu0 0.0
    %390 = vmatpush2.msra.mxu0 0.0
    %391 = vmatprep.subr.mxu0 0.0
    %392 = vmatpush2.msra.mxu0 0.0
    %393 = vmatprep.subr.mxu0 0.0
    %394 = vmatpush2.msra.mxu0 0.0
    %395 = vmatprep.subr.mxu0 0.0
    %396 = vmatpush2.msra.mxu0 0.0
    %397 = vmatprep.mubr.f32.mxu0 0.0
    %398 = vmatmul.mubr.f32.gmra.mxu0 %v328
    %v399 = vpop.f32.mrf.mxu0
    %v400 = vadd.f32 0.0, %v399
    %v401 = vpop.f32.mrf.mxu0
    %402 = vmatprep.mubr.f32.mxu0 0.0
    %403 = vmatmul.mubr.f32.gmra.mxu0 %v331
    %v404 = vpop.f32.mrf.mxu0
    %v405 = vadd.f32 0.0, %v404
    %v406 = vpop.f32.mrf.mxu0
    %407 = vdwg.mxu0
    %v408 = vmul.f32 %v323, 2.0
    %v410 = vlaneseq
    %v411 = vshrl.u32 %v410, 7
    %v412 = vsub.s32 0, %v411
    %v413 = vrot.slane %v408, %v412
    %415 = vmatprep.subr.mxu0 0.0
    %416 = vmatpush1.msra.mxu0 0.0
    %417 = vmatprep.subr.mxu0 0.0
    %418 = vmatpush1.msra.mxu0 0.0
    %419 = vmatprep.subr.mxu0 0.0
    %420 = vmatpush1.msra.mxu0 0.0
    %421 = vmatprep.subr.mxu0 0.0
    %422 = vmatpush1.msra.mxu0 0.0
    %423 = vmatprep.subr.mxu0 0.0
    %424 = vmatpush1.msra.mxu0 0.0
    %425 = vmatprep.subr.mxu0 0.0
    %426 = vmatpush1.msra.mxu0 0.0
    %427 = vmatprep.subr.mxu0 0.0
    %428 = vmatpush1.msra.mxu0 0.0
    %429 = vmatprep.subr.mxu0 0.0
    %430 = vmatpush1.msra.mxu0 0.0
    %431 = vmatprep.subr.mxu0 0.0
    %432 = vmatpush1.msra.mxu0 0.0
    %433 = vmatprep.subr.mxu0 0.0
    %434 = vmatpush1.msra.mxu0 0.0
    %435 = vmatprep.subr.mxu0 0.0
    %436 = vmatpush1.msra.mxu0 0.0
    %437 = vmatprep.subr.mxu0 0.0
    %438 = vmatpush1.msra.mxu0 0.0
    %439 = vmatprep.subr.mxu0 0.0
    %440 = vmatpush1.msra.mxu0 0.0
    %441 = vmatprep.subr.mxu0 0.0
    %442 = vmatpush1.msra.mxu0 0.0
    %443 = vmatprep.subr.mxu0 0.0
    %444 = vmatpush1.msra.mxu0 0.0
    %445 = vmatprep.subr.mxu0 0.0
    %446 = vmatpush1.msra.mxu0 %v400
    %447 = vmatprep.subr.mxu0 0.0
    %448 = vmatpush2.msra.mxu0 0.0
    %449 = vmatprep.subr.mxu0 0.0
    %450 = vmatpush2.msra.mxu0 0.0
    %451 = vmatprep.subr.mxu0 0.0
    %452 = vmatpush2.msra.mxu0 0.0
    %453 = vmatprep.subr.mxu0 0.0
    %454 = vmatpush2.msra.mxu0 0.0
    %455 = vmatprep.subr.mxu0 0.0
    %456 = vmatpush2.msra.mxu0 0.0
    %457 = vmatprep.subr.mxu0 0.0
    %458 = vmatpush2.msra.mxu0 0.0
    %459 = vmatprep.subr.mxu0 0.0
    %460 = vmatpush2.msra.mxu0 0.0
    %461 = vmatprep.subr.mxu0 0.0
    %462 = vmatpush2.msra.mxu0 0.0
    %463 = vmatprep.subr.mxu0 0.0
    %464 = vmatpush2.msra.mxu0 0.0
    %465 = vmatprep.subr.mxu0 0.0
    %466 = vmatpush2.msra.mxu0 0.0
    %467 = vmatprep.subr.mxu0 0.0
    %468 = vmatpush2.msra.mxu0 0.0
    %469 = vmatprep.subr.mxu0 0.0
    %470 = vmatpush2.msra.mxu0 0.0
    %471 = vmatprep.subr.mxu0 0.0
    %472 = vmatpush2.msra.mxu0 0.0
    %473 = vmatprep.subr.mxu0 0.0
    %474 = vmatpush2.msra.mxu0 0.0
    %475 = vmatprep.subr.mxu0 0.0
    %476 = vmatpush2.msra.mxu0 0.0
    %477 = vmatprep.subr.mxu0 0.0
    %478 = vmatpush2.msra.mxu0 0.0
    %479 = vmatprep.mubr.f32.mxu0 0.0
    %480 = vmatmul.mubr.f32.gmra.mxu0 %v157
    %v481 = vpop.f32.mrf.mxu0
    %v482 = vadd.f32 %v413, %v481
    %v483 = vpop.f32.mrf.mxu0
    %484 = vdwg.mxu0
    %485 = vmatprep.subr.mxu0 0.0
    %486 = vmatpush1.msra.mxu0 0.0
    %487 = vmatprep.subr.mxu0 0.0
    %488 = vmatpush1.msra.mxu0 0.0
    %489 = vmatprep.subr.mxu0 0.0
    %490 = vmatpush1.msra.mxu0 0.0
    %491 = vmatprep.subr.mxu0 0.0
    %492 = vmatpush1.msra.mxu0 0.0
    %493 = vmatprep.subr.mxu0 0.0
    %494 = vmatpush1.msra.mxu0 0.0
    %495 = vmatprep.subr.mxu0 0.0
    %496 = vmatpush1.msra.mxu0 0.0
    %497 = vmatprep.subr.mxu0 0.0
    %498 = vmatpush1.msra.mxu0 0.0
    %499 = vmatprep.subr.mxu0 0.0
    %500 = vmatpush1.msra.mxu0 0.0
    %501 = vmatprep.subr.mxu0 0.0
    %502 = vmatpush1.msra.mxu0 0.0
    %503 = vmatprep.subr.mxu0 0.0
    %504 = vmatpush1.msra.mxu0 0.0
    %505 = vmatprep.subr.mxu0 0.0
    %506 = vmatpush1.msra.mxu0 0.0
    %507 = vmatprep.subr.mxu0 0.0
    %508 = vmatpush1.msra.mxu0 0.0
    %509 = vmatprep.subr.mxu0 0.0
    %510 = vmatpush1.msra.mxu0 0.0
    %511 = vmatprep.subr.mxu0 0.0
    %512 = vmatpush1.msra.mxu0 0.0
    %513 = vmatprep.subr.mxu0 0.0
    %514 = vmatpush1.msra.mxu0 0.0
    %515 = vmatprep.subr.mxu0 0.0
    %516 = vmatpush1.msra.mxu0 %v405
    %517 = vmatprep.subr.mxu0 0.0
    %518 = vmatpush2.msra.mxu0 0.0
    %519 = vmatprep.subr.mxu0 0.0
    %520 = vmatpush2.msra.mxu0 0.0
    %521 = vmatprep.subr.mxu0 0.0
    %522 = vmatpush2.msra.mxu0 0.0
    %523 = vmatprep.subr.mxu0 0.0
    %524 = vmatpush2.msra.mxu0 0.0
    %525 = vmatprep.subr.mxu0 0.0
    %526 = vmatpush2.msra.mxu0 0.0
    %527 = vmatprep.subr.mxu0 0.0
    %528 = vmatpush2.msra.mxu0 0.0
    %529 = vmatprep.subr.mxu0 0.0
    %530 = vmatpush2.msra.mxu0 0.0
    %531 = vmatprep.subr.mxu0 0.0
    %532 = vmatpush2.msra.mxu0 0.0
    %533 = vmatprep.subr.mxu0 0.0
    %534 = vmatpush2.msra.mxu0 0.0
    %535 = vmatprep.subr.mxu0 0.0
    %536 = vmatpush2.msra.mxu0 0.0
    %537 = vmatprep.subr.mxu0 0.0
    %538 = vmatpush2.msra.mxu0 0.0
    %539 = vmatprep.subr.mxu0 0.0
    %540 = vmatpush2.msra.mxu0 0.0
    %541 = vmatprep.subr.mxu0 0.0
    %542 = vmatpush2.msra.mxu0 0.0
    %543 = vmatprep.subr.mxu0 0.0
    %544 = vmatpush2.msra.mxu0 0.0
    %545 = vmatprep.subr.mxu0 0.0
    %546 = vmatpush2.msra.mxu0 0.0
    %547 = vmatprep.subr.mxu0 0.0
    %548 = vmatpush2.msra.mxu0 0.0
    %549 = vmatprep.mubr.f32.mxu0 0.0
    %550 = vmatmul.mubr.f32.gmra.mxu0 %v230
    %v551 = vpop.f32.mrf.mxu0
    %v552 = vadd.f32 %v413, %v551
    %v553 = vpop.f32.mrf.mxu0
    %554 = vdwg.mxu0
    %v555 = vmul.f32 %v482, %v46
    %v556 = vmul.f32 %v552, %v48
    %v557 = vmax.f32 %v555, 0.0
    %v558 = vmax.f32 %v556, 0.0
    %561 = vrot.lane.b32.xlu0 %v557, 48
    %v562 = vpop.permute.xlu0 %561
    %563 = vrot.lane.b32.xlu0 %v558, 48
    %v564 = vpop.permute.xlu0 %563
    %vm567 = vcmask 523648
    %568 = vst.msk [vmem:[#allocation2] sm:$0xff] %vm567, %v562
    %569 = vst.msk [vmem:[#allocation2 + $0x8] sm:$0xff] %vm567, %v564
    %v570 = vld [vmem:[#allocation2] sm:$0xff]
    %v571 = vld [vmem:[#allocation2 + $0x8] sm:$0xff]
    %574 = vrot.lane.b32.xlu0 %v34, 32
    %v575 = vpop.permute.xlu0 %574
    %576 = vrot.lane.b32.xlu0 %v35, 32
    %v577 = vpop.permute.xlu0 %576
    %v580 = vadd.f32 %v570, %v575
    %v581 = vadd.f32 %v571, %v577
    %v582 = vld [vmem:[%s6] sm:$0xff]
    %v583 = vld [vmem:[%s6 + $0x8] sm:$0xff]
    %v584 = vld [vmem:[%s6 + $0x10] sm:$0xff]
    %v585 = vld [vmem:[%s6 + $0x18] sm:$0xff]
    %v586 = vld [vmem:[%s7] sm:$0x1]
    %v588 = vlaneseq
    %v589 = vshrl.u32 %v588, 7
    %v590 = vsub.s32 0, %v589
    %v591 = vrot.slane %v586, %v590
    %595 = vrot.lane.b32.xlu0 %v580, 96
    %v596 = vpop.permute.xlu0 %595
    %597 = vrot.lane.b32.xlu0 %v581, 96
    %v598 = vpop.permute.xlu0 %597
    %v599 = vsel %vm58, %v596, 0
    %v601 = vsel %vm58, %v598, 0
    %603 = vmatprep.subr.mxu0 0.0
    %604 = vmatpush1.msra.mxu0 0.0
    %605 = vmatprep.subr.mxu0 0.0
    %606 = vmatpush1.msra.mxu0 0.0
    %607 = vmatprep.subr.mxu0 0.0
    %608 = vmatpush1.msra.mxu0 0.0
    %609 = vmatprep.subr.mxu0 0.0
    %610 = vmatpush1.msra.mxu0 0.0
    %611 = vmatprep.subr.mxu0 0.0
    %612 = vmatpush1.msra.mxu0 0.0
    %613 = vmatprep.subr.mxu0 0.0
    %614 = vmatpush1.msra.mxu0 0.0
    %615 = vmatprep.subr.mxu0 0.0
    %616 = vmatpush1.msra.mxu0 0.0
    %617 = vmatprep.subr.mxu0 0.0
    %618 = vmatpush1.msra.mxu0 0.0
    %619 = vmatprep.subr.mxu0 0.0
    %620 = vmatpush1.msra.mxu0 0.0
    %621 = vmatprep.subr.mxu0 0.0
    %622 = vmatpush1.msra.mxu0 0.0
    %623 = vmatprep.subr.mxu0 0.0
    %624 = vmatpush1.msra.mxu0 0.0
    %625 = vmatprep.subr.mxu0 0.0
    %626 = vmatpush1.msra.mxu0 0.0
    %627 = vmatprep.subr.mxu0 0.0
    %628 = vmatpush1.msra.mxu0 %v585
    %629 = vmatprep.subr.mxu0 0.0
    %630 = vmatpush1.msra.mxu0 %v584
    %631 = vmatprep.subr.mxu0 0.0
    %632 = vmatpush1.msra.mxu0 %v583
    %633 = vmatprep.subr.mxu0 0.0
    %634 = vmatpush1.msra.mxu0 %v582
    %635 = vmatprep.subr.mxu0 0.0
    %636 = vmatpush2.msra.mxu0 0.0
    %637 = vmatprep.subr.mxu0 0.0
    %638 = vmatpush2.msra.mxu0 0.0
    %639 = vmatprep.subr.mxu0 0.0
    %640 = vmatpush2.msra.mxu0 0.0
    %641 = vmatprep.subr.mxu0 0.0
    %642 = vmatpush2.msra.mxu0 0.0
    %643 = vmatprep.subr.mxu0 0.0
    %644 = vmatpush2.msra.mxu0 0.0
    %645 = vmatprep.subr.mxu0 0.0
    %646 = vmatpush2.msra.mxu0 0.0
    %647 = vmatprep.subr.mxu0 0.0
    %648 = vmatpush2.msra.mxu0 0.0
    %649 = vmatprep.subr.mxu0 0.0
    %650 = vmatpush2.msra.mxu0 0.0
    %651 = vmatprep.subr.mxu0 0.0
    %652 = vmatpush2.msra.mxu0 0.0
    %653 = vmatprep.subr.mxu0 0.0
    %654 = vmatpush2.msra.mxu0 0.0
    %655 = vmatprep.subr.mxu0 0.0
    %656 = vmatpush2.msra.mxu0 0.0
    %657 = vmatprep.subr.mxu0 0.0
    %658 = vmatpush2.msra.mxu0 0.0
    %659 = vmatprep.subr.mxu0 0.0
    %660 = vmatpush2.msra.mxu0 0.0
    %661 = vmatprep.subr.mxu0 0.0
    %662 = vmatpush2.msra.mxu0 0.0
    %663 = vmatprep.subr.mxu0 0.0
    %664 = vmatpush2.msra.mxu0 0.0
    %665 = vmatprep.subr.mxu0 0.0
    %666 = vmatpush2.msra.mxu0 0.0
    %667 = vmatprep.mubr.f32.mxu0 0.0
    %668 = vmatmul.mubr.f32.gmra.mxu0 %v599
    %v669 = vpop.f32.mrf.mxu0
    %v670 = vadd.f32 %v591, %v669
    %v671 = vpop.f32.mrf.mxu0
    %672 = vmatprep.mubr.f32.mxu0 0.0
    %673 = vmatmul.mubr.f32.gmra.mxu0 %v601
    %v674 = vpop.f32.mrf.mxu0
    %v675 = vadd.f32 %v591, %v674
    %v676 = vpop.f32.mrf.mxu0
    %677 = vdwg.mxu0
    %678 = vst.msk [vmem:[#allocation3] sm:$0xff] %vm58, %v670
    %679 = vst.msk [vmem:[#allocation3 + $0x8] sm:$0xff] %vm58, %v675
    // Predicated region
    $region34: #{tpu_custom_call.1} parent=1 // pred_check
      _
    $region35: #{tpu_custom_call.1} parent=1 // pred_check_branch
      %681 = sbr.rel (0) target = $region37
    $region36: #{tpu_custom_call.1} parent=1 // pred_region
      %s683 = ssub.s32 256, 256
      %684 = vsyncadd [#allocation4], %s683
      %s685 = sshll.u32 [#allocation3], 4
      %s686 = int_to_ptr.vmem [resolvable:$true] %s685
      %691 = dma.vmem_to_hbm [thread:$0]  %s686, 256, %s8, [#allocation4], 128, 128, 8
    $region37: #{tpu_custom_call.1} parent=1 // pred_fallthru
      _
    // Predicated region
    $region38: #{tpu_custom_call.1} parent=1 // pred_check
      _
    $region39: #{tpu_custom_call.1} parent=1 // pred_check_branch
      %693 = sbr.rel (0) target = $region41
    $region40: #{tpu_custom_call.1} parent=1 // pred_region
      %694 = dma.done [#allocation4], 256
    $region41: #{tpu_custom_call.1} parent=1 // pred_fallthru
      _
    %695 = vsyncpa [#allocation4], 1

</llo_original>
